<compile_context>
chip_gen: v5e
topology: v5e:2x2
jax: 0.10.0
libtpu: 0.0.40
codegen_flags: <defaults>
</compile_context>

<pallas_src>
import jax
import jax.numpy as jnp
import numpy as np
from jax.experimental import pallas as pl
from jax.experimental.pallas import tpu as pltpu


def _copy_kernel(x_ref, o_ref):
    # Entire forward pass of ClassificationHead: return x.
    o_ref[...] = x_ref[...]


def _vmem_capacity_bytes():
    try:
        return int(pltpu.get_tpu_info().vmem_capacity_bytes)
    except Exception:
        return 32 * 1024 * 1024  # conservative fallback (v7x scoped default)


def _pick_lane_fold(B, F, *, max_width_elems=8192, min_rows=32):
    """Largest fold R (divides B) making the last dim R*F lane-dense while
    keeping enough rows for a multi-step grid."""
    for r in (64, 32, 16, 8, 4, 2):
        if B % r == 0 and (B // r) >= min_rows and r * F <= max_width_elems:
            return r
    return 1


def _pick_row_tile(Bp, W, itemsize, vmem_bytes):
    """Rows per block: ~2 MiB blocks, double-buffered in+out (4x block) well
    under 1/4 of VMEM, >=4 grid steps when possible, multiple of 8 sublanes."""
    row_bytes = W * itemsize
    target_block_bytes = 2 * 1024 * 1024
    cap_by_vmem = max(1, (vmem_bytes // 4) // (4 * row_bytes))
    tb = max(1, min(target_block_bytes // row_bytes, cap_by_vmem))
    tb = min(tb, max(8, pl.cdiv(Bp, 4)))     # keep >= ~4 grid steps
    if tb >= Bp:
        return Bp                            # single full-extent block
    tb = max(8, (tb // 8) * 8)               # (8,128) sublane constraint
    return min(tb, Bp)


def classification_head_forward(x, *, use_pallas_copy=False):
    """Pallas/JAX implementation of ClassificationHead.forward.

    The reference forward() is an identity, so the default (and fastest) path
    is simply `return x`.  `use_pallas_copy=True` runs the optimized identity
    copy kernel, kept as scaffolding for a future fused-fc version.
    """
    if not use_pallas_copy:
        return x  # exact semantics of the reference module; zero HBM traffic

    B, F = x.shape
    itemsize = jnp.dtype(x.dtype).itemsize

    # Lane-dense slab: fold rows into the lane dimension (free layout plumbing
    # for a row-major identity copy).
    R = _pick_lane_fold(B, F)
    Bp, W = B // R, R * F
    xw = x.reshape(Bp, W)

    vmem_cap = _vmem_capacity_bytes()
    tb = _pick_row_tile(Bp, W, itemsize, vmem_cap)
    grid = (pl.cdiv(Bp, tb),)

    block_bytes = tb * W * itemsize
    # Enough for double-buffered in+out plus headroom; never above physical.
    vmem_limit = int(min(vmem_cap, max(32 * 1024 * 1024, 6 * block_bytes)))

    out = pl.pallas_call(
        _copy_kernel,
        out_shape=jax.ShapeDtypeStruct((Bp, W), x.dtype),
        grid_spec=pl.GridSpec(
            grid=grid,
            in_specs=[pl.BlockSpec((tb, W), lambda i: (i, 0))],
            out_specs=pl.BlockSpec((tb, W), lambda i: (i, 0)),
        ),
        compiler_params=pltpu.CompilerParams(
            dimension_semantics=("parallel",),
            vmem_limit_bytes=vmem_limit,
        ),
        cost_estimate=pl.CostEstimate(
            flops=0, transcendentals=0, bytes_accessed=2 * B * F * itemsize
        ),
    )(xw)
    return out.reshape(B, F)


def init_params(key, in_features, out_features):
    """Deterministic init of the fc parameters, mirroring
    nn.Linear(in_features, out_features).  They are *not* used in forward()
    because the reference module never applies self.fc."""
    kw, kb = jax.random.split(key)
    bound = 1.0 / jnp.sqrt(in_features)
    w = jax.random.uniform(kw, (out_features, in_features), jnp.float32,
                           minval=-bound, maxval=bound)
    b = jax.random.uniform(kb, (out_features,), jnp.float32,
                           minval=-bound, maxval=bound)
    return {"fc_weight": w, "fc_bias": b}
    # TODO(synk): fc params are never applied because the reference forward()
    # returns x unmodified; if the module is ever fixed to call self.fc(x),
    # fuse the matmul here (MXU, f32 VMEM accumulator, K as last grid axis
    # marked "arbitrary", M "parallel", and pad N=out_features up to 128 for
    # unmasked lane-dense stores) instead of chaining an identity copy.


if __name__ == "__main__":
    key = jax.random.PRNGKey(0)
    kx, kp = jax.random.split(key)

    # Small, hardware-friendly shapes: 256 rows (multiple of 8 sublanes),
    # 128 features (full lane width).  Folds to a (32, 1024) lane-dense slab
    # with a 4-step grid in the scaffolding kernel path.
    batch, in_features, out_features = 256, 128, 8
    x = jax.random.normal(kx, (batch, in_features), dtype=jnp.float32)

    # Parameter init kept outside any benchmarked region (dead compute for
    # this forward path).
    params = init_params(kp, in_features, out_features)

    x_np = np.asarray(x)

    # Production path: zero-cost identity (no kernel launch).
    y_fast = jax.block_until_ready(classification_head_forward(x))
    assert y_fast.shape == (batch, in_features)
    assert y_fast.dtype == x.dtype
    assert np.allclose(np.asarray(y_fast), x_np)

    # Scaffolding path: run the Pallas kernel once to verify it compiles and
    # runs cleanly on TPU.
    y_kernel = jax.block_until_ready(
        classification_head_forward(x, use_pallas_copy=True)
    )
    assert y_kernel.shape == (batch, in_features)
    assert y_kernel.dtype == x.dtype
    assert np.allclose(np.asarray(y_kernel), x_np)

    print("KERNEL_OK")
</pallas_src>

<mosaic_0001>
module attributes {stable_mosaic.version = 11 : i64} {
  func.func @_copy_kernel(%arg0: i32, %arg1: memref<8x1024xf32, #tpu.memory_space<vmem>>, %arg2: memref<8x1024xf32, #tpu.memory_space<vmem>>) attributes {dimension_semantics = [#tpu.dimension_semantics<parallel>], iteration_bounds = array<i64: 4>, scalar_prefetch = 0 : i64, scratch_operands = 0 : i64, tpu.core_type = #tpu.core_type<tc>, window_params = [{transform_indices = @transform_0, window_bounds = array<i64: 8, 1024>}, {transform_indices = @transform_1, window_bounds = array<i64: 8, 1024>}]} {
    %c0 = arith.constant 0 : index
    %c0_0 = arith.constant 0 : index
    %0 = vector.load %arg1[%c0, %c0_0] : memref<8x1024xf32, #tpu.memory_space<vmem>>, vector<8x1024xf32>
    %c0_1 = arith.constant 0 : index
    %c0_2 = arith.constant 0 : index
    %1 = vector.load %arg2[%c0_1, %c0_2] : memref<8x1024xf32, #tpu.memory_space<vmem>>, vector<8x1024xf32>
    tpu.vector_store %arg2[%c0_1, %c0_2], %0 {strides = array<i32>} : memref<8x1024xf32, #tpu.memory_space<vmem>>, vector<8x1024xf32>,
    return
  }
  func.func @transform_0(%arg0: i32) -> (i32, i32) {
    %c0_i32 = arith.constant 0 : i32
    %c0_i32_0 = arith.constant 0 : i32
    return %arg0, %c0_i32 : i32, i32
  }
  func.func @transform_1(%arg0: i32) -> (i32, i32) {
    %c0_i32 = arith.constant 0 : i32
    %c0_i32_0 = arith.constant 0 : i32
    return %arg0, %c0_i32 : i32, i32
  }
}

</mosaic_0001>

<llo_original>
// kernel: tpu_custom_call.1
$region0: #{tpu_custom_call.1}
  #allocation0 [shape = 'u32[]', space=smem, size = 0x4, offset = 0x4, fixed_abs, tag = 'smem constant byte address 0x4 - core index']
  #allocation1 [shape = 'u32[72,128]{1,0:T(1,128)}', space=vmem, size = 0x9000, scoped, tag = 'internal scratch']
  %s0 = inlined_call_operand.hbm [shape: f32[32,1024], index: 0, kind: input, shape index: {}]
  %s1 = inlined_call_operand.hbm [shape: f32[32,1024], index: 1, kind: output, shape index: {}]
  %s2 = sld [smem:[#allocation0]]
  $region41: #{tpu_custom_call.1} parent=0
    _
  %s4 = ssub.s32 1, %s2
  %s5 = scalar_select 0, %s4, %s2
  $region1: #{tpu_custom_call.1} parent=0
    #allocation2 [shape = 'u8[65536]{0}', space=vmem, size = 0x10000, scoped, tag = 'input window, operand 0']
    #allocation3 [shape = 's32[2]{0}', space=sflag, size = 0x8, scoped, tag = 'scoped memory for tpu_custom_call.1']
    #allocation4 [shape = 's32[2]{0}', space=sflag, size = 0x8, scoped, tag = 'scoped memory for tpu_custom_call.1']
    #allocation5 [shape = 'u8[65536]{0}', space=vmem, size = 0x10000, scoped, tag = 'output window, operand 0']
    %6 = vsyncpa [#allocation3], 0
    %s7 = scalar_lea.sflag [#allocation3], 1
    %8 = vsyncpa %s7, 0
    %9 = vsyncpa [#allocation4], 0
    %s10 = scalar_lea.sflag [#allocation4], 1
    %11 = vsyncpa %s10, 0
    loop: start=0, step=1, limit=6
    $region2: #{tpu_custom_call.1} parent=1 // loop_pre_header
      _
    $region3: #{tpu_custom_call.1} parent=1 // loop_header
      %s13 = sphi 0, %s17
      %p14 = scmp.ge.s32.totalorder %s13, 6
      %s23 = sphi 0, %s25
      %s26 = sphi 0, %s23
      %s27 = sphi 0, %s26
      %s43 = sphi 0, %s27
      %s49 = sphi 0, %s51
      %s52 = sphi 0, %s49
      %s53 = sphi 0, %s52
      %s69 = sphi 0, %s53
    $region4: #{tpu_custom_call.1} parent=1 // loop_header_branch
      %16 = sbr.rel (%p14) target = $region8
    $region5: #{tpu_custom_call.1} parent=1 // loop_body
      %s18 = ssub.s32 %s13, 1
      %s19 = ssub.s32 %s13, 2
      %s20 = sadd.s32 %s13, 1
      %s21 = ssub.s32 %s13, %s20
      %p22 = scmp.eq.s32.totalorder %s21, 0
      %s24 = sadd.s32 %s23, 1
      %s25 = scalar_select %p22, %s23, %s24
      %p28 = pneg %p22
      %p29 = scmp.eq.s32.totalorder %s13, 3
      %p30 = por %p28, %p29
      %p31 = scmp.ne.s32.totalorder %s23, %s26
      %p32 = scmp.eq.s32.totalorder %s13, 0
      %p33 = por %p31, %p32
      %p34 = scmp.ne.s32.totalorder %s23, %s26
      %p35 = scmp.eq.s32.totalorder %s18, 3
      %p36 = por %p34, %p35
      %p37 = scmp.ne.s32.totalorder %s26, %s27
      %p38 = scmp.eq.s32.totalorder %s18, 0
      %p39 = por %p37, %p38
      %p40 = scmp.ne.s32.totalorder %s26, %s27
      %p41 = scmp.eq.s32.totalorder %s19, 3
      %p42 = por %p40, %p41
      %p44 = scmp.ne.s32.totalorder %s27, %s43
      %p45 = scmp.eq.s32.totalorder %s19, 0
      %p46 = por %p44, %p45
      %s47 = ssub.s32 %s13, %s20
      %p48 = scmp.eq.s32.totalorder %s47, 0
      %s50 = sadd.s32 %s49, 1
      %s51 = scalar_select %p48, %s49, %s50
      %p54 = pneg %p48
      %p55 = scmp.eq.s32.totalorder %s13, 3
      %p56 = por %p54, %p55
      %p57 = scmp.ne.s32.totalorder %s49, %s52
      %p58 = scmp.eq.s32.totalorder %s13, 0
      %p59 = por %p57, %p58
      %p60 = scmp.ne.s32.totalorder %s49, %s52
      %p61 = scmp.eq.s32.totalorder %s18, 3
      %p62 = por %p60, %p61
      %p63 = scmp.ne.s32.totalorder %s52, %s53
      %p64 = scmp.eq.s32.totalorder %s18, 0
      %p65 = por %p63, %p64
      %p66 = scmp.ne.s32.totalorder %s52, %s53
      %p67 = scmp.eq.s32.totalorder %s19, 3
      %p68 = por %p66, %p67
      %p70 = scmp.ne.s32.totalorder %s53, %s69
      %p71 = scmp.eq.s32.totalorder %s19, 0
      %p72 = por %p70, %p71
      %p73 = scmp.le.s32.totalorder 1, %s13
      %p74 = scmp.lt.s32.totalorder %s13, 5
      %p75 = pnand %p73, %p74
      %p76 = pneg %p75
      // Predicated region
      $region9: #{tpu_custom_call.1} parent=5 // pred_check
        _
      $region10: #{tpu_custom_call.1} parent=5 // pred_check_branch
        %78 = sbr.rel (%p75) target = $region12
      $region11: #{tpu_custom_call.1} parent=5 // pred_region
        %s79 = ssub.s32 %s13, 1
      $region12: #{tpu_custom_call.1} parent=5 // pred_fallthru
        _
      %p80 = scmp.lt.s32.totalorder %s13, 4
      // Predicated region
      $region13: #{tpu_custom_call.1} parent=5 // pred_check
        %p81 = pneg %p80
      $region14: #{tpu_custom_call.1} parent=5 // pred_check_branch
        %83 = sbr.rel (%p81) target = $region16
      $region15: #{tpu_custom_call.1} parent=5 // pred_region
        // Predicated region
        $region17: #{tpu_custom_call.1} parent=15 // pred_check
          %p84 = pneg %p33
        $region18: #{tpu_custom_call.1} parent=15 // pred_check_branch
          %86 = sbr.rel (%p84) target = $region20
        $region19: #{tpu_custom_call.1} parent=15 // pred_region
          %s87 = sand.u32 %s23, 1
          %s88 = scalar_lea.sflag [#allocation3], %s87
          %s89 = sand.u32 %s23, 1
          %s90 = smul.addr %s89, 64
          %s91 = scalar_lea.vmem [#allocation2], %s90
          %93 = vsyncadd %s88, 0
          %s94 = smul.addr %s13, 8
          %s95 = smul.addr %s94, 8
          %s96 = scalar_lea.hbm %s0, %s95
          %s98 = sshll.u32 %s96, 4
          %s99 = int_to_ptr.hbm [resolvable:$true] %s98
          %s100 = sshll.u32 %s91, 4
          %s101 = int_to_ptr.vmem [resolvable:$true] %s100
          %103 = dma.hbm_to_vmem [thread:$0]  %s99, 1024, %s101, %s88
        $region20: #{tpu_custom_call.1} parent=15 // pred_fallthru
          _
      $region16: #{tpu_custom_call.1} parent=5 // pred_fallthru
        _
      %p104 = scmp.le.s32.totalorder 1, %s13
      %p105 = scmp.lt.s32.totalorder %s13, 5
      %p106 = pnand %p104, %p105
      %p107 = pneg %p106
      // Predicated region
      $region21: #{tpu_custom_call.1} parent=5 // pred_check
        _
      $region22: #{tpu_custom_call.1} parent=5 // pred_check_branch
        %109 = sbr.rel (%p106) target = $region24
      $region23: #{tpu_custom_call.1} parent=5 // pred_region
        %s110 = ssub.s32 %s13, 1
        %s111 = sand.u32 %s26, 1
        %s112 = scalar_lea.sflag [#allocation3], %s111
        %s113 = sand.u32 %s26, 1
        %s114 = smul.addr %s113, 64
        %s115 = scalar_lea.vmem [#allocation2], %s114
        // Predicated region
        $region25: #{tpu_custom_call.1} parent=23 // pred_check
          %p116 = pneg %p39
        $region26: #{tpu_custom_call.1} parent=23 // pred_check_branch
          %118 = sbr.rel (%p116) target = $region28
        $region27: #{tpu_custom_call.1} parent=23 // pred_region
          %120 = dma.done %s112, 1024
        $region28: #{tpu_custom_call.1} parent=23 // pred_fallthru
          _
        %s121 = sand.u32 %s26, 1
        %s122 = scalar_lea.sflag [#allocation3], %s121
        %s123 = sand.u32 %s26, 1
        %s124 = smul.addr %s123, 64
        %s125 = scalar_lea.vmem [#allocation2], %s124
        %p126 = pneg %p39
        %p127 = pneg %p36
        %p128 = pneg %p65
        %p129 = pneg %p62
        %s130 = sand.u32 %s52, 1
        %s131 = scalar_lea.sflag [#allocation4], %s130
        %s132 = sand.u32 %s52, 1
        %s133 = smul.addr %s132, 64
        %s134 = scalar_lea.vmem [#allocation5], %s133
        %v135 = vld [vmem:[%s115] sm:$0xff]
        %v136 = vld [vmem:[%s115 + $0x8] sm:$0xff]
        %v137 = vld [vmem:[%s115 + $0x10] sm:$0xff]
        %v138 = vld [vmem:[%s115 + $0x18] sm:$0xff]
        %v139 = vld [vmem:[%s115 + $0x20] sm:$0xff]
        %v140 = vld [vmem:[%s115 + $0x28] sm:$0xff]
        %v141 = vld [vmem:[%s115 + $0x30] sm:$0xff]
        %v142 = vld [vmem:[%s115 + $0x38] sm:$0xff]
        %143 = vst [vmem:[%s134] sm:$0xff] %v135
        %144 = vst [vmem:[%s134 + $0x8] sm:$0xff] %v136
        %145 = vst [vmem:[%s134 + $0x10] sm:$0xff] %v137
        %146 = vst [vmem:[%s134 + $0x18] sm:$0xff] %v138
        %147 = vst [vmem:[%s134 + $0x20] sm:$0xff] %v139
        %148 = vst [vmem:[%s134 + $0x28] sm:$0xff] %v140
        %149 = vst [vmem:[%s134 + $0x30] sm:$0xff] %v141
        %150 = vst [vmem:[%s134 + $0x38] sm:$0xff] %v142
        %s151 = sand.u32 %s52, 1
        %s152 = scalar_lea.sflag [#allocation4], %s151
        %s153 = sand.u32 %s52, 1
        %s154 = smul.addr %s153, 64
        %s155 = scalar_lea.vmem [#allocation5], %s154
        // Predicated region
        $region29: #{tpu_custom_call.1} parent=23 // pred_check
          %p156 = pneg %p62
        $region30: #{tpu_custom_call.1} parent=23 // pred_check_branch
          %158 = sbr.rel (%p156) target = $region32
        $region31: #{tpu_custom_call.1} parent=23 // pred_region
          %160 = vsyncadd %s152, 0
          %s161 = smul.addr %s18, 8
          %s162 = smul.addr %s161, 8
          %s163 = scalar_lea.hbm %s1, %s162
          %s165 = sshll.u32 %s155, 4
          %s166 = int_to_ptr.vmem [resolvable:$true] %s165
          %s167 = sshll.u32 %s163, 4
          %s168 = int_to_ptr.hbm [resolvable:$true] %s167
          %170 = dma.vmem_to_hbm [thread:$0]  %s166, 1024, %s168, %s152
        $region32: #{tpu_custom_call.1} parent=23 // pred_fallthru
          _
      $region24: #{tpu_custom_call.1} parent=5 // pred_fallthru
        _
      %p171 = scmp.le.s32.totalorder 2, %s13
      // Predicated region
      $region33: #{tpu_custom_call.1} parent=5 // pred_check
        %p172 = pneg %p171
      $region34: #{tpu_custom_call.1} parent=5 // pred_check_branch
        %174 = sbr.rel (%p172) target = $region36
      $region35: #{tpu_custom_call.1} parent=5 // pred_region
        %s175 = ssub.s32 %s13, 2
        // Predicated region
        $region37: #{tpu_custom_call.1} parent=35 // pred_check
          %p176 = pneg %p68
        $region38: #{tpu_custom_call.1} parent=35 // pred_check_branch
          %178 = sbr.rel (%p176) target = $region40
        $region39: #{tpu_custom_call.1} parent=35 // pred_region
          %s179 = sand.u32 %s53, 1
          %s180 = scalar_lea.sflag [#allocation4], %s179
          %s181 = sand.u32 %s53, 1
          %s182 = smul.addr %s181, 64
          %s183 = scalar_lea.vmem [#allocation5], %s182
          %185 = dma.done %s180, 1024
        $region40: #{tpu_custom_call.1} parent=35 // pred_fallthru
          _
      $region36: #{tpu_custom_call.1} parent=5 // pred_fallthru
        _
    $region6: #{tpu_custom_call.1} parent=1 // loop_footer
      %s17 = sadd.s32 1, %s13
    $region7: #{tpu_custom_call.1} parent=1 // loop_footer_branch
      %12 = sbr.rel target = $region3
    $region8: #{tpu_custom_call.1} parent=1 // loop_exit
      _
    %186 = vsyncpa [#allocation3], 1
    %s187 = scalar_lea.sflag [#allocation3], 1
    %188 = vsyncpa %s187, 1
    %189 = vsyncpa [#allocation4], 1
    %s190 = scalar_lea.sflag [#allocation4], 1
    %191 = vsyncpa %s190, 1

</llo_original>
